<compile_context>
chip_gen: v5e
topology: v5e:2x2
jax: 0.10.0
libtpu: 0.0.40
codegen_flags: <defaults>
</compile_context>

<pallas_src>
import jax
import jax.numpy as jnp
from jax.experimental import pallas as pl
from jax.experimental.pallas import tpu as pltpu


def _add_kernel(a_ref, b_ref, o_ref):
    o_ref[...] = a_ref[...] + b_ref[...]


def _lane_dense_2d(total: int) -> tuple[int, int]:
    # Fill all 8 sublanes when possible and put the long axis on lanes.
    rows = 8 if total % 8 == 0 else 1
    return rows, total // rows


@jax.jit
def pallas_add(x653: jax.Array, x638: jax.Array) -> jax.Array:
    assert x653.shape == x638.shape and x653.dtype == x638.dtype
    orig_shape = x653.shape
    total = x653.size
    rows, cols = _lane_dense_2d(total)  # (8, 2107) for [1, 344, 7, 7] f32

    a2 = x653.reshape(rows, cols)
    b2 = x638.reshape(rows, cols)

    vmem_spec = pl.BlockSpec(memory_space=pltpu.MemorySpace.VMEM)

    out2 = pl.pallas_call(
        _add_kernel,
        out_shape=jax.ShapeDtypeStruct((rows, cols), x653.dtype),
        in_specs=[vmem_spec, vmem_spec],
        out_specs=vmem_spec,
        input_output_aliases={0: 0},
    )(a2, b2)

    return out2.reshape(orig_shape)


if __name__ == "__main__":
    key = jax.random.PRNGKey(0)
    k1, k2 = jax.random.split(key)
    # Shapes from the module: [1, 344, 7, 7]
    x653 = jax.random.normal(k1, (1, 344, 7, 7), dtype=jnp.float32)
    x638 = jax.random.normal(k2, (1, 344, 7, 7), dtype=jnp.float32)

    out = pallas_add(x653, x638)
    jax.block_until_ready(out)

    # Correctness check against plain JAX reference
    ref = x653 + x638
    assert out.shape == (1, 344, 7, 7)
    assert out.dtype == jnp.float32
    assert jnp.allclose(out, ref, atol=1e-6, rtol=1e-6)

    print("KERNEL_OK")
</pallas_src>

<mosaic_0001>
module attributes {stable_mosaic.version = 11 : i64} {
  func.func @_add_kernel(%arg0: memref<8x2107xf32, #tpu.memory_space<vmem>>, %arg1: memref<8x2107xf32, #tpu.memory_space<vmem>>, %arg2: memref<8x2107xf32, #tpu.memory_space<vmem>>) attributes {dimension_semantics = [], scalar_prefetch = 0 : i64, scratch_operands = 0 : i64, tpu.core_type = #tpu.core_type<tc>} {
    %c0 = arith.constant 0 : index
    %c0_0 = arith.constant 0 : index
    %0 = vector.load %arg0[%c0, %c0_0] : memref<8x2107xf32, #tpu.memory_space<vmem>>, vector<8x2107xf32>
    %c0_1 = arith.constant 0 : index
    %c0_2 = arith.constant 0 : index
    %1 = vector.load %arg1[%c0_1, %c0_2] : memref<8x2107xf32, #tpu.memory_space<vmem>>, vector<8x2107xf32>
    %2 = arith.addf %0, %1 : vector<8x2107xf32>
    %c0_3 = arith.constant 0 : index
    %c0_4 = arith.constant 0 : index
    %3 = vector.load %arg2[%c0_3, %c0_4] : memref<8x2107xf32, #tpu.memory_space<vmem>>, vector<8x2107xf32>
    tpu.vector_store %arg2[%c0_3, %c0_4], %2 {strides = array<i32>} : memref<8x2107xf32, #tpu.memory_space<vmem>>, vector<8x2107xf32>,
    return
  }
}

</mosaic_0001>

<llo_original>
// kernel: pallas_add.1
$region0: #{pallas_add.1}
  #allocation0 [shape = 'u32[]', space=smem, size = 0x4, offset = 0x4, fixed_abs, tag = 'smem constant byte address 0x4 - core index']
  #allocation1 [shape = 'u32[72,128]{1,0:T(1,128)}', space=vmem, size = 0x9000, scoped, tag = 'internal scratch']
  %s0 = inlined_call_operand.vmem [shape: f32[8,2107], index: 0, kind: input, shape index: {}, may-alias: {0,2}]
  %s1 = inlined_call_operand.vmem [shape: f32[8,2107], index: 1, kind: input, shape index: {}]
  %s2 = inlined_call_operand.vmem [shape: f32[8,2107], index: 2, kind: output, shape index: {}, may-alias: {0,2}]
  %s3 = sld [smem:[#allocation0]]
  $region18: #{pallas_add.1} parent=0
    _
  %s5 = ssub.s32 1, %s3
  %s6 = scalar_select 0, %s5, %s3
  // Predicated region
  $region2: #{pallas_add.1} parent=0 // pred_check
    _
  $region3: #{pallas_add.1} parent=0 // pred_check_branch
    %8 = sbr.rel (0) target = $region5
  $region4: #{pallas_add.1} parent=0 // pred_region
    _
  $region5: #{pallas_add.1} parent=0 // pred_fallthru
    _
  // Predicated region
  $region6: #{pallas_add.1} parent=0 // pred_check
    _
  $region7: #{pallas_add.1} parent=0 // pred_check_branch
    %10 = sbr.rel (0) target = $region9
  $region8: #{pallas_add.1} parent=0 // pred_region
    _
  $region9: #{pallas_add.1} parent=0 // pred_fallthru
    _
  %v11 = vld [vmem:[%s0] sm:$0xff]
  %v12 = vld [vmem:[%s0 + $0x8] sm:$0xff]
  %v13 = vld [vmem:[%s0 + $0x10] sm:$0xff]
  %v14 = vld [vmem:[%s0 + $0x18] sm:$0xff]
  %v15 = vld [vmem:[%s0 + $0x20] sm:$0xff]
  %v16 = vld [vmem:[%s0 + $0x28] sm:$0xff]
  %v17 = vld [vmem:[%s0 + $0x30] sm:$0xff]
  %v18 = vld [vmem:[%s0 + $0x38] sm:$0xff]
  %v19 = vld [vmem:[%s0 + $0x40] sm:$0xff]
  %v20 = vld [vmem:[%s0 + $0x48] sm:$0xff]
  %v21 = vld [vmem:[%s0 + $0x50] sm:$0xff]
  %v22 = vld [vmem:[%s0 + $0x58] sm:$0xff]
  %v23 = vld [vmem:[%s0 + $0x60] sm:$0xff]
  %v24 = vld [vmem:[%s0 + $0x68] sm:$0xff]
  %v25 = vld [vmem:[%s0 + $0x70] sm:$0xff]
  %v26 = vld [vmem:[%s0 + $0x78] sm:$0xff]
  %v27 = vld [vmem:[%s0 + $0x80] sm:$0xff]
  %v28 = vld [vmem:[%s1] sm:$0xff]
  %v29 = vld [vmem:[%s1 + $0x8] sm:$0xff]
  %v30 = vld [vmem:[%s1 + $0x10] sm:$0xff]
  %v31 = vld [vmem:[%s1 + $0x18] sm:$0xff]
  %v32 = vld [vmem:[%s1 + $0x20] sm:$0xff]
  %v33 = vld [vmem:[%s1 + $0x28] sm:$0xff]
  %v34 = vld [vmem:[%s1 + $0x30] sm:$0xff]
  %v35 = vld [vmem:[%s1 + $0x38] sm:$0xff]
  %v36 = vld [vmem:[%s1 + $0x40] sm:$0xff]
  %v37 = vld [vmem:[%s1 + $0x48] sm:$0xff]
  %v38 = vld [vmem:[%s1 + $0x50] sm:$0xff]
  %v39 = vld [vmem:[%s1 + $0x58] sm:$0xff]
  %v40 = vld [vmem:[%s1 + $0x60] sm:$0xff]
  %v41 = vld [vmem:[%s1 + $0x68] sm:$0xff]
  %v42 = vld [vmem:[%s1 + $0x70] sm:$0xff]
  %v43 = vld [vmem:[%s1 + $0x78] sm:$0xff]
  %v44 = vld [vmem:[%s1 + $0x80] sm:$0xff]
  %v45 = vadd.f32 %v11, %v28
  %v46 = vadd.f32 %v12, %v29
  %v47 = vadd.f32 %v13, %v30
  %v48 = vadd.f32 %v14, %v31
  %v49 = vadd.f32 %v15, %v32
  %v50 = vadd.f32 %v16, %v33
  %v51 = vadd.f32 %v17, %v34
  %v52 = vadd.f32 %v18, %v35
  %v53 = vadd.f32 %v19, %v36
  %v54 = vadd.f32 %v20, %v37
  %v55 = vadd.f32 %v21, %v38
  %v56 = vadd.f32 %v22, %v39
  %v57 = vadd.f32 %v23, %v40
  %v58 = vadd.f32 %v24, %v41
  %v59 = vadd.f32 %v25, %v42
  %v60 = vadd.f32 %v26, %v43
  %v61 = vadd.f32 %v27, %v44
  %62 = vst [vmem:[%s2] sm:$0xff] %v45
  %63 = vst [vmem:[%s2 + $0x8] sm:$0xff] %v46
  %64 = vst [vmem:[%s2 + $0x10] sm:$0xff] %v47
  %65 = vst [vmem:[%s2 + $0x18] sm:$0xff] %v48
  %66 = vst [vmem:[%s2 + $0x20] sm:$0xff] %v49
  %67 = vst [vmem:[%s2 + $0x28] sm:$0xff] %v50
  %68 = vst [vmem:[%s2 + $0x30] sm:$0xff] %v51
  %69 = vst [vmem:[%s2 + $0x38] sm:$0xff] %v52
  %70 = vst [vmem:[%s2 + $0x40] sm:$0xff] %v53
  %71 = vst [vmem:[%s2 + $0x48] sm:$0xff] %v54
  %72 = vst [vmem:[%s2 + $0x50] sm:$0xff] %v55
  %73 = vst [vmem:[%s2 + $0x58] sm:$0xff] %v56
  %74 = vst [vmem:[%s2 + $0x60] sm:$0xff] %v57
  %75 = vst [vmem:[%s2 + $0x68] sm:$0xff] %v58
  %76 = vst [vmem:[%s2 + $0x70] sm:$0xff] %v59
  %77 = vst [vmem:[%s2 + $0x78] sm:$0xff] %v60
  %vm78 = vcmask 482304
  %79 = vst.msk [vmem:[%s2 + $0x80] sm:$0xff] %vm78, %v61
  // Predicated region
  $region10: #{pallas_add.1} parent=0 // pred_check
    _
  $region11: #{pallas_add.1} parent=0 // pred_check_branch
    %81 = sbr.rel (0) target = $region13
  $region12: #{pallas_add.1} parent=0 // pred_region
    _
  $region13: #{pallas_add.1} parent=0 // pred_fallthru
    _
  // Predicated region
  $region14: #{pallas_add.1} parent=0 // pred_check
    _
  $region15: #{pallas_add.1} parent=0 // pred_check_branch
    %83 = sbr.rel (0) target = $region17
  $region16: #{pallas_add.1} parent=0 // pred_region
    _
  $region17: #{pallas_add.1} parent=0 // pred_fallthru
    _

</llo_original>
